<compile_context>
chip_gen: v5e
topology: v5e:2x2
jax: 0.10.0
libtpu: 0.0.40
codegen_flags: <defaults>
</compile_context>

<pallas_src>
import functools

import jax
import jax.numpy as jnp
from jax.experimental import pallas as pl
from jax.experimental.pallas import tpu as pltpu


def involution_kernel(params_ref, x_ref, o_ref, *, B, C, C1):
    """Single-invocation kernel.

    params_ref : SMEM (C1*C + 2*C1,) f32
                 [ (bn_scale*W1) (C1,C) row-major | bn_shift (C1,) | sum_c2 W2 (C1,) ]
    x_ref      : VMEM (B*C, HW)
    o_ref      : VMEM (B*C*B, HW)
    """
    x = x_ref[...]  # (B*C, HW), lane-dense (HW multiple of 128)

    # --- dynamic involution weight, fully folded:
    # wsum[k] = sum_c1 w2sum[c1] * relu( sum_c (scale*W1)[c1,c] * x[k,c,:] + shift[c1] )
    wsum = []
    for k in range(B):
        acc = None
        for c1 in range(C1):
            h = None
            for c in range(C):
                t = params_ref[c1 * C + c] * x[k * C + c:k * C + c + 1, :]
                h = t if h is None else h + t
            h = jnp.maximum(h + params_ref[C1 * C + c1], 0.0)       # BN shift + ReLU
            t2 = params_ref[C1 * C + C1 + c1] * h                   # folded Conv2 + channel sum
            acc = t2 if acc is None else acc + t2
        wsum.append(acc)                                            # (1, HW)

    # --- cross-batch broadcast: out[i, g*B + k, :] = x[i, g, :] * wsum[k]
    for k in range(B):
        prod_k = x * wsum[k]                                        # (B*C, HW) dense VPU mul
        for i in range(B):
            for g in range(C):
                r = i * (C * B) + g * B + k
                o_ref[r:r + 1, :] = prod_k[i * C + g:i * C + g + 1, :]


def involution_pallas(x_nchw, w1, w2, gamma, beta, rmean, rvar, eps=1e-5):
    """x_nchw: (B, C, H, W) f32; w1: (C1, C); w2: (C2, C1). Returns (B, C*B, H, W)."""
    B, C, H, W = x_nchw.shape
    HW = H * W
    C1 = w1.shape[0]

    # Fold BN (inference affine) into Conv1; fold the channel sum into Conv2.
    scale = gamma / jnp.sqrt(rvar + eps)                 # (C1,)
    shift = beta - rmean * scale                         # (C1,)
    w1s = (w1 * scale[:, None]).astype(jnp.float32)      # (C1, C)
    w2sum = jnp.sum(w2, axis=0).astype(jnp.float32)      # (C1,)
    params = jnp.concatenate(
        [w1s.reshape(-1), shift.reshape(-1).astype(jnp.float32), w2sum.reshape(-1)]
    )                                                    # (C1*C + 2*C1,)

    # NCHW -> (B*C, HW): pure row-major reshape, no transpose.
    x2d = x_nchw.reshape(B * C, HW).astype(jnp.float32)

    kernel = functools.partial(involution_kernel, B=B, C=C, C1=C1)
    out2d = pl.pallas_call(
        kernel,
        out_shape=jax.ShapeDtypeStruct((B * C * B, HW), jnp.float32),
        grid=(1,),
        in_specs=[
            pl.BlockSpec(memory_space=pltpu.MemorySpace.SMEM),      # folded scalar params
            pl.BlockSpec((B * C, HW), lambda i: (0, 0)),
        ],
        out_specs=pl.BlockSpec((B * C * B, HW), lambda i: (0, 0)),
        compiler_params=pltpu.CompilerParams(dimension_semantics=("arbitrary",)),
    )(params, x2d)

    # (B*C*B, HW) -> (B, C*B, H, W): pure row-major reshape, no transpose.
    return out2d.reshape(B, C * B, H, W)


def involution_reference(x_nchw, w1, w2, gamma, beta, rmean, rvar, eps=1e-5):
    """Pure-JAX mirror of the PyTorch forward (channels=4, K=1, stride=1, gc=1)."""
    C = x_nchw.shape[1]
    h1 = jnp.einsum('oc,bchw->bohw', w1, x_nchw)                     # Conv1 1x1
    scale = gamma / jnp.sqrt(rvar + eps)
    shift = beta - rmean * scale
    h1 = jnp.maximum(h1 * scale[None, :, None, None] + shift[None, :, None, None], 0.0)
    weight = jnp.einsum('oc,bchw->bohw', w2, h1)                     # Conv2 1x1
    b, c, h, w = weight.shape
    unf = x_nchw.reshape(b, C * 1, h * w)                            # nn.Unfold(K=1, pad=0)
    out = unf.reshape(b, C, 1, h, w)[:, :, None]                     # .view(...).unsqueeze(2)
    out = (weight * out).sum(axis=3).reshape(b, -1, h, w)            # same broadcasting as torch
    return out


if __name__ == "__main__":
    # Module config (the only family of configs for which the torch forward runs):
    # channels=4, kernel_size=1, stride=1, group_channels=1, reduction_ratio=4
    B, C, H, W = 2, 4, 16, 16
    C1 = C // 4          # out_channel_1
    G = C // 1           # groups (group_channels = 1)
    C2 = 1 * 1 * G       # out_channel_2 = K^2 * groups

    key = jax.random.PRNGKey(0)
    kx, k1, k2 = jax.random.split(key, 3)
    x = jax.random.normal(kx, (B, C, H, W), dtype=jnp.float32)
    # deterministic parameter init (synthetic; torch conv weight layout squeezed to 2D)
    w1 = 0.2 * jax.random.normal(k1, (C1, C), dtype=jnp.float32)   # Conv1: (out, in)
    w2 = 0.2 * jax.random.normal(k2, (C2, C1), dtype=jnp.float32)  # Conv2: (out, in)
    gamma = jnp.ones((C1,), jnp.float32)
    beta = jnp.zeros((C1,), jnp.float32)
    rmean = jnp.zeros((C1,), jnp.float32)
    rvar = jnp.ones((C1,), jnp.float32)

    out = involution_pallas(x, w1, w2, gamma, beta, rmean, rvar)
    out = jax.block_until_ready(out)

    ref = involution_reference(x, w1, w2, gamma, beta, rmean, rvar)
    assert out.shape == (B, C * B, H, W), out.shape
    assert jnp.allclose(out, ref, rtol=1e-4, atol=1e-4), float(jnp.max(jnp.abs(out - ref)))

    print("KERNEL_OK")
</pallas_src>

<mosaic_0001>
module attributes {stable_mosaic.version = 11 : i64} {
  func.func @involution_kernel(%arg0: i32, %arg1: memref<6xf32, #tpu.memory_space<smem>>, %arg2: memref<8x256xf32, #tpu.memory_space<vmem>>, %arg3: memref<16x256xf32, #tpu.memory_space<vmem>>) attributes {dimension_semantics = [#tpu.dimension_semantics<arbitrary>], iteration_bounds = array<i64: 1>, scalar_prefetch = 0 : i64, scratch_operands = 0 : i64, tpu.core_type = #tpu.core_type<tc>, window_params = [{transform_indices = @transform_0, window_bounds = array<i64: 6>}, {pipeline_mode = #tpu.pipeline_mode<synchronous>, transform_indices = @transform_1, window_bounds = array<i64: 8, 256>}, {pipeline_mode = #tpu.pipeline_mode<synchronous>, transform_indices = @transform_2, window_bounds = array<i64: 16, 256>}]} {
    %c0 = arith.constant 0 : index
    %c0_0 = arith.constant 0 : index
    %0 = vector.load %arg2[%c0, %c0_0] : memref<8x256xf32, #tpu.memory_space<vmem>>, vector<8x256xf32>
    %c0_1 = arith.constant 0 : index
    %1 = memref.load %arg1[%c0_1] : memref<6xf32, #tpu.memory_space<smem>>
    %2 = vector.extract_strided_slice %0 {offsets = [0, 0], sizes = [1, 256], strides = [1, 1]} : vector<8x256xf32> to vector<1x256xf32>
    %3 = vector.broadcast %1 : f32 to vector<1x256xf32>
    %4 = arith.mulf %3, %2 : vector<1x256xf32>
    %c1 = arith.constant 1 : index
    %5 = memref.load %arg1[%c1] : memref<6xf32, #tpu.memory_space<smem>>
    %6 = vector.extract_strided_slice %0 {offsets = [1, 0], sizes = [1, 256], strides = [1, 1]} : vector<8x256xf32> to vector<1x256xf32>
    %7 = vector.broadcast %5 : f32 to vector<1x256xf32>
    %8 = arith.mulf %7, %6 : vector<1x256xf32>
    %9 = arith.addf %4, %8 : vector<1x256xf32>
    %c2 = arith.constant 2 : index
    %10 = memref.load %arg1[%c2] : memref<6xf32, #tpu.memory_space<smem>>
    %11 = vector.extract_strided_slice %0 {offsets = [2, 0], sizes = [1, 256], strides = [1, 1]} : vector<8x256xf32> to vector<1x256xf32>
    %12 = vector.broadcast %10 : f32 to vector<1x256xf32>
    %13 = arith.mulf %12, %11 : vector<1x256xf32>
    %14 = arith.addf %9, %13 : vector<1x256xf32>
    %c3 = arith.constant 3 : index
    %15 = memref.load %arg1[%c3] : memref<6xf32, #tpu.memory_space<smem>>
    %16 = vector.extract_strided_slice %0 {offsets = [3, 0], sizes = [1, 256], strides = [1, 1]} : vector<8x256xf32> to vector<1x256xf32>
    %17 = vector.broadcast %15 : f32 to vector<1x256xf32>
    %18 = arith.mulf %17, %16 : vector<1x256xf32>
    %19 = arith.addf %14, %18 : vector<1x256xf32>
    %c4 = arith.constant 4 : index
    %20 = memref.load %arg1[%c4] : memref<6xf32, #tpu.memory_space<smem>>
    %21 = vector.broadcast %20 : f32 to vector<1x256xf32>
    %22 = arith.addf %19, %21 : vector<1x256xf32>
    %cst = arith.constant 0.000000e+00 : f32
    %23 = vector.broadcast %cst : f32 to vector<1x256xf32>
    %24 = arith.maximumf %22, %23 : vector<1x256xf32>
    %c5 = arith.constant 5 : index
    %25 = memref.load %arg1[%c5] : memref<6xf32, #tpu.memory_space<smem>>
    %26 = vector.broadcast %25 : f32 to vector<1x256xf32>
    %27 = arith.mulf %26, %24 : vector<1x256xf32>
    %c0_2 = arith.constant 0 : index
    %28 = memref.load %arg1[%c0_2] : memref<6xf32, #tpu.memory_space<smem>>
    %29 = vector.extract_strided_slice %0 {offsets = [4, 0], sizes = [1, 256], strides = [1, 1]} : vector<8x256xf32> to vector<1x256xf32>
    %30 = vector.broadcast %28 : f32 to vector<1x256xf32>
    %31 = arith.mulf %30, %29 : vector<1x256xf32>
    %c1_3 = arith.constant 1 : index
    %32 = memref.load %arg1[%c1_3] : memref<6xf32, #tpu.memory_space<smem>>
    %33 = vector.extract_strided_slice %0 {offsets = [5, 0], sizes = [1, 256], strides = [1, 1]} : vector<8x256xf32> to vector<1x256xf32>
    %34 = vector.broadcast %32 : f32 to vector<1x256xf32>
    %35 = arith.mulf %34, %33 : vector<1x256xf32>
    %36 = arith.addf %31, %35 : vector<1x256xf32>
    %c2_4 = arith.constant 2 : index
    %37 = memref.load %arg1[%c2_4] : memref<6xf32, #tpu.memory_space<smem>>
    %38 = vector.extract_strided_slice %0 {offsets = [6, 0], sizes = [1, 256], strides = [1, 1]} : vector<8x256xf32> to vector<1x256xf32>
    %39 = vector.broadcast %37 : f32 to vector<1x256xf32>
    %40 = arith.mulf %39, %38 : vector<1x256xf32>
    %41 = arith.addf %36, %40 : vector<1x256xf32>
    %c3_5 = arith.constant 3 : index
    %42 = memref.load %arg1[%c3_5] : memref<6xf32, #tpu.memory_space<smem>>
    %43 = vector.extract_strided_slice %0 {offsets = [7, 0], sizes = [1, 256], strides = [1, 1]} : vector<8x256xf32> to vector<1x256xf32>
    %44 = vector.broadcast %42 : f32 to vector<1x256xf32>
    %45 = arith.mulf %44, %43 : vector<1x256xf32>
    %46 = arith.addf %41, %45 : vector<1x256xf32>
    %c4_6 = arith.constant 4 : index
    %47 = memref.load %arg1[%c4_6] : memref<6xf32, #tpu.memory_space<smem>>
    %48 = vector.broadcast %47 : f32 to vector<1x256xf32>
    %49 = arith.addf %46, %48 : vector<1x256xf32>
    %cst_7 = arith.constant 0.000000e+00 : f32
    %50 = vector.broadcast %cst_7 : f32 to vector<1x256xf32>
    %51 = arith.maximumf %49, %50 : vector<1x256xf32>
    %c5_8 = arith.constant 5 : index
    %52 = memref.load %arg1[%c5_8] : memref<6xf32, #tpu.memory_space<smem>>
    %53 = vector.broadcast %52 : f32 to vector<1x256xf32>
    %54 = arith.mulf %53, %51 : vector<1x256xf32>
    %55 = vector.broadcast %27 : vector<1x256xf32> to vector<8x256xf32>
    %56 = arith.mulf %0, %55 : vector<8x256xf32>
    %57 = vector.extract_strided_slice %56 {offsets = [0, 0], sizes = [1, 256], strides = [1, 1]} : vector<8x256xf32> to vector<1x256xf32>
    %c0_9 = arith.constant 0 : index
    %c0_10 = arith.constant 0 : index
    %58 = vector.load %arg3[%c0_9, %c0_10] : memref<16x256xf32, #tpu.memory_space<vmem>>, vector<1x256xf32>
    tpu.vector_store %arg3[%c0_9, %c0_10], %57 {strides = array<i32>} : memref<16x256xf32, #tpu.memory_space<vmem>>, vector<1x256xf32>,
    %59 = vector.extract_strided_slice %56 {offsets = [1, 0], sizes = [1, 256], strides = [1, 1]} : vector<8x256xf32> to vector<1x256xf32>
    %c2_11 = arith.constant 2 : index
    %c0_12 = arith.constant 0 : index
    %60 = vector.load %arg3[%c2_11, %c0_12] : memref<16x256xf32, #tpu.memory_space<vmem>>, vector<1x256xf32>
    tpu.vector_store %arg3[%c2_11, %c0_12], %59 {strides = array<i32>} : memref<16x256xf32, #tpu.memory_space<vmem>>, vector<1x256xf32>,
    %61 = vector.extract_strided_slice %56 {offsets = [2, 0], sizes = [1, 256], strides = [1, 1]} : vector<8x256xf32> to vector<1x256xf32>
    %c4_13 = arith.constant 4 : index
    %c0_14 = arith.constant 0 : index
    %62 = vector.load %arg3[%c4_13, %c0_14] : memref<16x256xf32, #tpu.memory_space<vmem>>, vector<1x256xf32>
    tpu.vector_store %arg3[%c4_13, %c0_14], %61 {strides = array<i32>} : memref<16x256xf32, #tpu.memory_space<vmem>>, vector<1x256xf32>,
    %63 = vector.extract_strided_slice %56 {offsets = [3, 0], sizes = [1, 256], strides = [1, 1]} : vector<8x256xf32> to vector<1x256xf32>
    %c6 = arith.constant 6 : index
    %c0_15 = arith.constant 0 : index
    %64 = vector.load %arg3[%c6, %c0_15] : memref<16x256xf32, #tpu.memory_space<vmem>>, vector<1x256xf32>
    tpu.vector_store %arg3[%c6, %c0_15], %63 {strides = array<i32>} : memref<16x256xf32, #tpu.memory_space<vmem>>, vector<1x256xf32>,
    %65 = vector.extract_strided_slice %56 {offsets = [4, 0], sizes = [1, 256], strides = [1, 1]} : vector<8x256xf32> to vector<1x256xf32>
    %c8 = arith.constant 8 : index
    %c0_16 = arith.constant 0 : index
    %66 = vector.load %arg3[%c8, %c0_16] : memref<16x256xf32, #tpu.memory_space<vmem>>, vector<1x256xf32>
    tpu.vector_store %arg3[%c8, %c0_16], %65 {strides = array<i32>} : memref<16x256xf32, #tpu.memory_space<vmem>>, vector<1x256xf32>,
    %67 = vector.extract_strided_slice %56 {offsets = [5, 0], sizes = [1, 256], strides = [1, 1]} : vector<8x256xf32> to vector<1x256xf32>
    %c10 = arith.constant 10 : index
    %c0_17 = arith.constant 0 : index
    %68 = vector.load %arg3[%c10, %c0_17] : memref<16x256xf32, #tpu.memory_space<vmem>>, vector<1x256xf32>
    tpu.vector_store %arg3[%c10, %c0_17], %67 {strides = array<i32>} : memref<16x256xf32, #tpu.memory_space<vmem>>, vector<1x256xf32>,
    %69 = vector.extract_strided_slice %56 {offsets = [6, 0], sizes = [1, 256], strides = [1, 1]} : vector<8x256xf32> to vector<1x256xf32>
    %c12 = arith.constant 12 : index
    %c0_18 = arith.constant 0 : index
    %70 = vector.load %arg3[%c12, %c0_18] : memref<16x256xf32, #tpu.memory_space<vmem>>, vector<1x256xf32>
    tpu.vector_store %arg3[%c12, %c0_18], %69 {strides = array<i32>} : memref<16x256xf32, #tpu.memory_space<vmem>>, vector<1x256xf32>,
    %71 = vector.extract_strided_slice %56 {offsets = [7, 0], sizes = [1, 256], strides = [1, 1]} : vector<8x256xf32> to vector<1x256xf32>
    %c14 = arith.constant 14 : index
    %c0_19 = arith.constant 0 : index
    %72 = vector.load %arg3[%c14, %c0_19] : memref<16x256xf32, #tpu.memory_space<vmem>>, vector<1x256xf32>
    tpu.vector_store %arg3[%c14, %c0_19], %71 {strides = array<i32>} : memref<16x256xf32, #tpu.memory_space<vmem>>, vector<1x256xf32>,
    %73 = vector.broadcast %54 : vector<1x256xf32> to vector<8x256xf32>
    %74 = arith.mulf %0, %73 : vector<8x256xf32>
    %75 = vector.extract_strided_slice %74 {offsets = [0, 0], sizes = [1, 256], strides = [1, 1]} : vector<8x256xf32> to vector<1x256xf32>
    %c1_20 = arith.constant 1 : index
    %c0_21 = arith.constant 0 : index
    %76 = vector.load %arg3[%c1_20, %c0_21] : memref<16x256xf32, #tpu.memory_space<vmem>>, vector<1x256xf32>
    tpu.vector_store %arg3[%c1_20, %c0_21], %75 {strides = array<i32>} : memref<16x256xf32, #tpu.memory_space<vmem>>, vector<1x256xf32>,
    %77 = vector.extract_strided_slice %74 {offsets = [1, 0], sizes = [1, 256], strides = [1, 1]} : vector<8x256xf32> to vector<1x256xf32>
    %c3_22 = arith.constant 3 : index
    %c0_23 = arith.constant 0 : index
    %78 = vector.load %arg3[%c3_22, %c0_23] : memref<16x256xf32, #tpu.memory_space<vmem>>, vector<1x256xf32>
    tpu.vector_store %arg3[%c3_22, %c0_23], %77 {strides = array<i32>} : memref<16x256xf32, #tpu.memory_space<vmem>>, vector<1x256xf32>,
    %79 = vector.extract_strided_slice %74 {offsets = [2, 0], sizes = [1, 256], strides = [1, 1]} : vector<8x256xf32> to vector<1x256xf32>
    %c5_24 = arith.constant 5 : index
    %c0_25 = arith.constant 0 : index
    %80 = vector.load %arg3[%c5_24, %c0_25] : memref<16x256xf32, #tpu.memory_space<vmem>>, vector<1x256xf32>
    tpu.vector_store %arg3[%c5_24, %c0_25], %79 {strides = array<i32>} : memref<16x256xf32, #tpu.memory_space<vmem>>, vector<1x256xf32>,
    %81 = vector.extract_strided_slice %74 {offsets = [3, 0], sizes = [1, 256], strides = [1, 1]} : vector<8x256xf32> to vector<1x256xf32>
    %c7 = arith.constant 7 : index
    %c0_26 = arith.constant 0 : index
    %82 = vector.load %arg3[%c7, %c0_26] : memref<16x256xf32, #tpu.memory_space<vmem>>, vector<1x256xf32>
    tpu.vector_store %arg3[%c7, %c0_26], %81 {strides = array<i32>} : memref<16x256xf32, #tpu.memory_space<vmem>>, vector<1x256xf32>,
    %83 = vector.extract_strided_slice %74 {offsets = [4, 0], sizes = [1, 256], strides = [1, 1]} : vector<8x256xf32> to vector<1x256xf32>
    %c9 = arith.constant 9 : index
    %c0_27 = arith.constant 0 : index
    %84 = vector.load %arg3[%c9, %c0_27] : memref<16x256xf32, #tpu.memory_space<vmem>>, vector<1x256xf32>
    tpu.vector_store %arg3[%c9, %c0_27], %83 {strides = array<i32>} : memref<16x256xf32, #tpu.memory_space<vmem>>, vector<1x256xf32>,
    %85 = vector.extract_strided_slice %74 {offsets = [5, 0], sizes = [1, 256], strides = [1, 1]} : vector<8x256xf32> to vector<1x256xf32>
    %c11 = arith.constant 11 : index
    %c0_28 = arith.constant 0 : index
    %86 = vector.load %arg3[%c11, %c0_28] : memref<16x256xf32, #tpu.memory_space<vmem>>, vector<1x256xf32>
    tpu.vector_store %arg3[%c11, %c0_28], %85 {strides = array<i32>} : memref<16x256xf32, #tpu.memory_space<vmem>>, vector<1x256xf32>,
    %87 = vector.extract_strided_slice %74 {offsets = [6, 0], sizes = [1, 256], strides = [1, 1]} : vector<8x256xf32> to vector<1x256xf32>
    %c13 = arith.constant 13 : index
    %c0_29 = arith.constant 0 : index
    %88 = vector.load %arg3[%c13, %c0_29] : memref<16x256xf32, #tpu.memory_space<vmem>>, vector<1x256xf32>
    tpu.vector_store %arg3[%c13, %c0_29], %87 {strides = array<i32>} : memref<16x256xf32, #tpu.memory_space<vmem>>, vector<1x256xf32>,
    %89 = vector.extract_strided_slice %74 {offsets = [7, 0], sizes = [1, 256], strides = [1, 1]} : vector<8x256xf32> to vector<1x256xf32>
    %c15 = arith.constant 15 : index
    %c0_30 = arith.constant 0 : index
    %90 = vector.load %arg3[%c15, %c0_30] : memref<16x256xf32, #tpu.memory_space<vmem>>, vector<1x256xf32>
    tpu.vector_store %arg3[%c15, %c0_30], %89 {strides = array<i32>} : memref<16x256xf32, #tpu.memory_space<vmem>>, vector<1x256xf32>,
    return
  }
  func.func @transform_0(%arg0: i32) -> i32 {
    %c0_i32 = arith.constant 0 : i32
    %c0_i32_0 = arith.constant 0 : i32
    return %c0_i32 : i32
  }
  func.func @transform_1(%arg0: i32) -> (i32, i32) {
    %c0_i32 = arith.constant 0 : i32
    %c0_i32_0 = arith.constant 0 : i32
    %c0_i32_1 = arith.constant 0 : i32
    return %c0_i32, %c0_i32_0 : i32, i32
  }
  func.func @transform_2(%arg0: i32) -> (i32, i32) {
    %c0_i32 = arith.constant 0 : i32
    %c0_i32_0 = arith.constant 0 : i32
    %c0_i32_1 = arith.constant 0 : i32
    return %c0_i32, %c0_i32_0 : i32, i32
  }
}

</mosaic_0001>

<llo_original>
// kernel: tpu_custom_call.1
$region0: #{tpu_custom_call.1}
  #allocation0 [shape = 'u32[]', space=smem, size = 0x4, offset = 0x4, fixed_abs, tag = 'smem constant byte address 0x4 - core index']
  #allocation1 [shape = 'u32[72,128]{1,0:T(1,128)}', space=vmem, size = 0x9000, scoped, tag = 'internal scratch']
  %s0 = inlined_call_operand.hbm [shape: f32[6], index: 0, kind: input, shape index: {}]
  %s1 = inlined_call_operand.hbm [shape: f32[8,256], index: 1, kind: input, shape index: {}]
  %s2 = inlined_call_operand.hbm [shape: f32[16,256], index: 2, kind: output, shape index: {}]
  %s3 = sld [smem:[#allocation0]]
  $region26: #{tpu_custom_call.1} parent=0
    _
  %s5 = ssub.s32 1, %s3
  %s6 = scalar_select 0, %s5, %s3
  $region1: #{tpu_custom_call.1} parent=0
    #allocation2 [shape = 'u8[512]{0}', space=smem, size = 0x200, scoped, tag = 'input window, operand 0, single buffered']
    #allocation3 [shape = 's32[1]{0}', space=sflag, size = 0x4, scoped, tag = 'scoped memory for tpu_custom_call.1']
    #allocation4 [shape = 's32[1]{0}', space=sflag, size = 0x4, scoped, tag = 'scoped memory for tpu_custom_call.1']
    #allocation5 [shape = 's32[1]{0}', space=sflag, size = 0x4, scoped, tag = 'scoped memory for tpu_custom_call.1']
    #allocation6 [shape = 'u8[8192]{0}', space=vmem, size = 0x2000, scoped, tag = 'input window, operand 1, single buffered']
    #allocation7 [shape = 'u8[16384]{0}', space=vmem, size = 0x4000, scoped, tag = 'output window, operand 0, single buffered']
    %7 = vsyncpa [#allocation5], 0
    %8 = vsyncpa [#allocation3], 0
    %9 = vsyncpa [#allocation4], 0
    // Predicated region
    $region2: #{tpu_custom_call.1} parent=1 // pred_check
      _
    $region3: #{tpu_custom_call.1} parent=1 // pred_check_branch
      %11 = sbr.rel (0) target = $region5
    $region4: #{tpu_custom_call.1} parent=1 // pred_region
      %13 = vsyncadd [#allocation5], 0
      %s15 = sshll.u32 %s0, 4
      %s16 = int_to_ptr.hbm [resolvable:$true] %s15
      %18 = dma.hbm_to_smem %s16, 16, [#allocation2], [#allocation5]
    $region5: #{tpu_custom_call.1} parent=1 // pred_fallthru
      _
    // Predicated region
    $region6: #{tpu_custom_call.1} parent=1 // pred_check
      _
    $region7: #{tpu_custom_call.1} parent=1 // pred_check_branch
      %20 = sbr.rel (0) target = $region9
    $region8: #{tpu_custom_call.1} parent=1 // pred_region
      %22 = vsyncadd [#allocation3], 0
      %s24 = sshll.u32 %s1, 4
      %s25 = int_to_ptr.hbm [resolvable:$true] %s24
      %s26 = sshll.u32 [#allocation6], 4
      %s27 = int_to_ptr.vmem [resolvable:$true] %s26
      %29 = dma.hbm_to_vmem [thread:$0]  %s25, 256, %s27, [#allocation3]
    $region9: #{tpu_custom_call.1} parent=1 // pred_fallthru
      _
    // Predicated region
    $region10: #{tpu_custom_call.1} parent=1 // pred_check
      _
    $region11: #{tpu_custom_call.1} parent=1 // pred_check_branch
      %31 = sbr.rel (0) target = $region13
    $region12: #{tpu_custom_call.1} parent=1 // pred_region
      %33 = dma.done [#allocation5], 16
    $region13: #{tpu_custom_call.1} parent=1 // pred_fallthru
      _
    // Predicated region
    $region14: #{tpu_custom_call.1} parent=1 // pred_check
      _
    $region15: #{tpu_custom_call.1} parent=1 // pred_check_branch
      %35 = sbr.rel (0) target = $region17
    $region16: #{tpu_custom_call.1} parent=1 // pred_region
      %37 = dma.done [#allocation3], 256
    $region17: #{tpu_custom_call.1} parent=1 // pred_fallthru
      _
    %38 = sfence
    %v39 = vld [vmem:[#allocation6] sm:$0xff]
    %v40 = vld [vmem:[#allocation6 + $0x8] sm:$0xff]
    %s41 = sld [smem:[#allocation2]]
    %v42 = vstv %s41
    %v43 = vmul.f32 %v42, %v39
    %v44 = vmul.f32 %v42, %v40
    %s45 = sld [smem:[#allocation2 + $0x1]]
    %v46 = vstv %s45
    %v47 = vmul.f32 %v46, %v39
    %v48 = vmul.f32 %v46, %v40
    %v51 = vrot.slane %v47, 1
    %v52 = vrot.slane %v48, 1
    %v55 = vadd.f32 %v43, %v51
    %v56 = vadd.f32 %v44, %v52
    %s57 = sld [smem:[#allocation2 + $0x2]]
    %v58 = vstv %s57
    %v59 = vmul.f32 %v58, %v39
    %v60 = vmul.f32 %v58, %v40
    %v63 = vrot.slane %v59, 2
    %v64 = vrot.slane %v60, 2
    %v67 = vadd.f32 %v55, %v63
    %v68 = vadd.f32 %v56, %v64
    %s69 = sld [smem:[#allocation2 + $0x3]]
    %v70 = vstv %s69
    %v71 = vmul.f32 %v70, %v39
    %v72 = vmul.f32 %v70, %v40
    %v75 = vrot.slane %v71, 3
    %v76 = vrot.slane %v72, 3
    %v79 = vadd.f32 %v67, %v75
    %v80 = vadd.f32 %v68, %v76
    %s81 = sld [smem:[#allocation2 + $0x4]]
    %v82 = vstv %s81
    %v83 = vadd.f32 %v79, %v82
    %v84 = vadd.f32 %v80, %v82
    %v85 = vmax.f32 %v83, 0.0
    %v86 = vmax.f32 %v84, 0.0
    %s87 = sld [smem:[#allocation2 + $0x5]]
    %v88 = vstv %s87
    %v89 = vmul.f32 %v88, %v85
    %v90 = vmul.f32 %v88, %v86
    %v91 = vperm.slane %v89, 0
    %v92 = vperm.slane %v90, 0
    %v93 = vmul.f32 %v39, %v91
    %v94 = vmul.f32 %v40, %v92
    %v97 = vrot.slane %v94, 7
    %vm98 = vcmask 1040384
    %v99 = vsel %vm98, %v93, %v97
    %v101 = vlaneseq
    %vm102 = vcmp.ge.s32.totalorder %v101, 0
    %vm103 = vcmp.lt.s32.totalorder %v101, 256
    %vm104 = vmand %vm102, %vm103
    %105 = vst.msk [vmem:[#allocation7] ss:$8 sm:$0x3] %vm104, %v99
    %106 = vst.msk [vmem:[#allocation7] ss:$8 sm:$0x0] %vm104, %v99
    %107 = vst [vmem:[#allocation1] sm:$0xff] %v93
    %108 = vst [vmem:[#allocation1 + $0x9] sm:$0xff] %v94
    %s109 = scalar_lea.vmem [#allocation1], 1
    %v110 = vld [vmem:[%s109] ss:$9 sm:$0xff]
    %s112 = scalar_lea.vmem [#allocation7], 2
    %113 = vst.msk [vmem:[%s112] ss:$8 sm:$0x3] %vm104, %v110
    %114 = vst.msk [vmem:[%s112] ss:$8 sm:$0x0] %vm104, %v110
    %115 = vst [vmem:[#allocation1] sm:$0xff] %v93
    %116 = vst [vmem:[#allocation1 + $0x9] sm:$0xff] %v94
    %s117 = scalar_lea.vmem [#allocation1], 2
    %v118 = vld [vmem:[%s117] ss:$9 sm:$0xff]
    %s120 = scalar_lea.vmem [#allocation7], 4
    %121 = vst.msk [vmem:[%s120] ss:$8 sm:$0x3] %vm104, %v118
    %122 = vst.msk [vmem:[%s120] ss:$8 sm:$0x0] %vm104, %v118
    %123 = vst [vmem:[#allocation1] sm:$0xff] %v93
    %124 = vst [vmem:[#allocation1 + $0x9] sm:$0xff] %v94
    %s125 = scalar_lea.vmem [#allocation1], 3
    %v126 = vld [vmem:[%s125] ss:$9 sm:$0xff]
    %s128 = scalar_lea.vmem [#allocation7], 6
    %129 = vst.msk [vmem:[%s128] ss:$8 sm:$0x3] %vm104, %v126
    %130 = vst.msk [vmem:[%s128] ss:$8 sm:$0x0] %vm104, %v126
    %131 = vst [vmem:[#allocation1] sm:$0xff] %v93
    %132 = vst [vmem:[#allocation1 + $0x9] sm:$0xff] %v94
    %s133 = scalar_lea.vmem [#allocation1], 4
    %v134 = vld [vmem:[%s133] ss:$9 sm:$0xff]
    %s136 = scalar_lea.vmem [#allocation7], 16
    %137 = vst.msk [vmem:[%s136] ss:$8 sm:$0x3] %vm104, %v134
    %138 = vst.msk [vmem:[%s136] ss:$8 sm:$0x0] %vm104, %v134
    %139 = vst [vmem:[#allocation1] sm:$0xff] %v93
    %140 = vst [vmem:[#allocation1 + $0x9] sm:$0xff] %v94
    %s141 = scalar_lea.vmem [#allocation1], 5
    %v142 = vld [vmem:[%s141] ss:$9 sm:$0xff]
    %s144 = scalar_lea.vmem [#allocation7], 18
    %145 = vst.msk [vmem:[%s144] ss:$8 sm:$0x3] %vm104, %v142
    %146 = vst.msk [vmem:[%s144] ss:$8 sm:$0x0] %vm104, %v142
    %147 = vst [vmem:[#allocation1] sm:$0xff] %v93
    %148 = vst [vmem:[#allocation1 + $0x9] sm:$0xff] %v94
    %s149 = scalar_lea.vmem [#allocation1], 6
    %v150 = vld [vmem:[%s149] ss:$9 sm:$0xff]
    %s152 = scalar_lea.vmem [#allocation7], 20
    %153 = vst.msk [vmem:[%s152] ss:$8 sm:$0x3] %vm104, %v150
    %154 = vst.msk [vmem:[%s152] ss:$8 sm:$0x0] %vm104, %v150
    %155 = vst [vmem:[#allocation1] sm:$0xff] %v93
    %156 = vst [vmem:[#allocation1 + $0x9] sm:$0xff] %v94
    %s157 = scalar_lea.vmem [#allocation1], 7
    %v158 = vld [vmem:[%s157] ss:$9 sm:$0xff]
    %s160 = scalar_lea.vmem [#allocation7], 22
    %161 = vst.msk [vmem:[%s160] ss:$8 sm:$0x3] %vm104, %v158
    %162 = vst.msk [vmem:[%s160] ss:$8 sm:$0x0] %vm104, %v158
    %v163 = vperm.slane %v89, 4
    %v164 = vperm.slane %v90, 4
    %v165 = vmul.f32 %v39, %v163
    %v166 = vmul.f32 %v40, %v164
    %v169 = vrot.slane %v166, 7
    %v170 = vsel %vm98, %v165, %v169
    %s172 = scalar_lea.vmem [#allocation7], 1
    %173 = vst.msk [vmem:[%s172] ss:$8 sm:$0x3] %vm104, %v170
    %174 = vst.msk [vmem:[%s172] ss:$8 sm:$0x0] %vm104, %v170
    %175 = vst [vmem:[#allocation1] sm:$0xff] %v165
    %176 = vst [vmem:[#allocation1 + $0x9] sm:$0xff] %v166
    %s177 = scalar_lea.vmem [#allocation1], 1
    %v178 = vld [vmem:[%s177] ss:$9 sm:$0xff]
    %s180 = scalar_lea.vmem [#allocation7], 3
    %181 = vst.msk [vmem:[%s180] ss:$8 sm:$0x3] %vm104, %v178
    %182 = vst.msk [vmem:[%s180] ss:$8 sm:$0x0] %vm104, %v178
    %183 = vst [vmem:[#allocation1] sm:$0xff] %v165
    %184 = vst [vmem:[#allocation1 + $0x9] sm:$0xff] %v166
    %s185 = scalar_lea.vmem [#allocation1], 2
    %v186 = vld [vmem:[%s185] ss:$9 sm:$0xff]
    %s188 = scalar_lea.vmem [#allocation7], 5
    %189 = vst.msk [vmem:[%s188] ss:$8 sm:$0x3] %vm104, %v186
    %190 = vst.msk [vmem:[%s188] ss:$8 sm:$0x0] %vm104, %v186
    %191 = vst [vmem:[#allocation1] sm:$0xff] %v165
    %192 = vst [vmem:[#allocation1 + $0x9] sm:$0xff] %v166
    %s193 = scalar_lea.vmem [#allocation1], 3
    %v194 = vld [vmem:[%s193] ss:$9 sm:$0xff]
    %s196 = scalar_lea.vmem [#allocation7], 7
    %197 = vst.msk [vmem:[%s196] ss:$8 sm:$0x3] %vm104, %v194
    %198 = vst.msk [vmem:[%s196] ss:$8 sm:$0x0] %vm104, %v194
    %199 = vst [vmem:[#allocation1] sm:$0xff] %v165
    %200 = vst [vmem:[#allocation1 + $0x9] sm:$0xff] %v166
    %s201 = scalar_lea.vmem [#allocation1], 4
    %v202 = vld [vmem:[%s201] ss:$9 sm:$0xff]
    %s204 = scalar_lea.vmem [#allocation7], 17
    %205 = vst.msk [vmem:[%s204] ss:$8 sm:$0x3] %vm104, %v202
    %206 = vst.msk [vmem:[%s204] ss:$8 sm:$0x0] %vm104, %v202
    %207 = vst [vmem:[#allocation1] sm:$0xff] %v165
    %208 = vst [vmem:[#allocation1 + $0x9] sm:$0xff] %v166
    %s209 = scalar_lea.vmem [#allocation1], 5
    %v210 = vld [vmem:[%s209] ss:$9 sm:$0xff]
    %s212 = scalar_lea.vmem [#allocation7], 19
    %213 = vst.msk [vmem:[%s212] ss:$8 sm:$0x3] %vm104, %v210
    %214 = vst.msk [vmem:[%s212] ss:$8 sm:$0x0] %vm104, %v210
    %215 = vst [vmem:[#allocation1] sm:$0xff] %v165
    %216 = vst [vmem:[#allocation1 + $0x9] sm:$0xff] %v166
    %s217 = scalar_lea.vmem [#allocation1], 6
    %v218 = vld [vmem:[%s217] ss:$9 sm:$0xff]
    %s220 = scalar_lea.vmem [#allocation7], 21
    %221 = vst.msk [vmem:[%s220] ss:$8 sm:$0x3] %vm104, %v218
    %222 = vst.msk [vmem:[%s220] ss:$8 sm:$0x0] %vm104, %v218
    %223 = vst [vmem:[#allocation1] sm:$0xff] %v165
    %224 = vst [vmem:[#allocation1 + $0x9] sm:$0xff] %v166
    %s225 = scalar_lea.vmem [#allocation1], 7
    %v226 = vld [vmem:[%s225] ss:$9 sm:$0xff]
    %s228 = scalar_lea.vmem [#allocation7], 23
    %229 = vst.msk [vmem:[%s228] ss:$8 sm:$0x3] %vm104, %v226
    %230 = vst.msk [vmem:[%s228] ss:$8 sm:$0x0] %vm104, %v226
    // Predicated region
    $region18: #{tpu_custom_call.1} parent=1 // pred_check
      _
    $region19: #{tpu_custom_call.1} parent=1 // pred_check_branch
      %232 = sbr.rel (0) target = $region21
    $region20: #{tpu_custom_call.1} parent=1 // pred_region
      %234 = vsyncadd [#allocation4], 0
      %s235 = sshll.u32 [#allocation7], 4
      %s236 = int_to_ptr.vmem [resolvable:$true] %s235
      %s237 = sshll.u32 %s2, 4
      %s238 = int_to_ptr.hbm [resolvable:$true] %s237
      %243 = dma.vmem_to_hbm [thread:$0]  %s236, 512, %s238, [#allocation4], 256, 256, 16
    $region21: #{tpu_custom_call.1} parent=1 // pred_fallthru
      _
    // Predicated region
    $region22: #{tpu_custom_call.1} parent=1 // pred_check
      _
    $region23: #{tpu_custom_call.1} parent=1 // pred_check_branch
      %245 = sbr.rel (0) target = $region25
    $region24: #{tpu_custom_call.1} parent=1 // pred_region
      %247 = dma.done [#allocation4], 512
    $region25: #{tpu_custom_call.1} parent=1 // pred_fallthru
      _
    %248 = vsyncpa [#allocation3], 1
    %249 = vsyncpa [#allocation4], 1
    %250 = vsyncpa [#allocation5], 1

</llo_original>
